<compile_context>
chip_gen: v7x
topology: tpu7x:2x2x1
jax: 0.10.0
libtpu: 0.0.40
codegen_flags: <defaults>
</compile_context>

<pallas_src>
import jax
import jax.numpy as jnp
from jax.experimental import pallas as pl
from jax.experimental.pallas import tpu as pltpu

IN_DIM = 768 * 3   # 2304
H1 = 200
H2 = 40
H3 = 20
OUT_DIM = 2
BN_EPS = 1e-5


# ---------------------------------------------------------------------------
# Kernel: one (T, 2304) @ (2304, 2) matmul + bias + 2-class softmax.
# One grid step processes a (TILE_N, 2304) slab of x; W_total/b_total use a
# constant index_map so they are DMA'd once and stay VMEM-resident.
# ---------------------------------------------------------------------------
def mlp_multi_kernel(x_ref, w_ref, b_ref, out_ref):
    x = x_ref[...]                                                    # (T, 2304)
    logits = jnp.dot(x, w_ref[...],
                     preferred_element_type=jnp.float32) + b_ref[...]  # (T, 2)

    # softmax over 2 classes == sigmoid of the logit difference (exact).
    d = logits[:, 0:1] - logits[:, 1:2]                               # (T, 1)
    p0 = jax.nn.sigmoid(d)
    out_ref[...] = jnp.concatenate([p0, 1.0 - p0], axis=-1).astype(out_ref.dtype)


def _round_up(n, m):
    return ((n + m - 1) // m) * m


def _pick_tile_n(n, max_tile=1024):
    """Batch tile: multiple of 8, <= max_tile, and (when there is enough work)
    at least 2 grid steps so the v7x megacore split has something to shard.
    At tile 1024 the f32 x double-buffer is ~19 MiB -> fits every generation's
    VMEM (v7x: 64 MiB physical) under the 32 MiB scoped limit below."""
    n8 = _round_up(n, 8)
    if n8 <= 16:
        return n8
    return min(max_tile, _round_up(pl.cdiv(n8, 2), 8))


def mlp_multi_forward(x, folded, tile_n=None):
    """x: (N, 2304) float32.  folded: dict from fold_params() (fully folded)."""
    n = x.shape[0]
    if tile_n is None:
        tile_n = _pick_tile_n(n)
    assert tile_n % 8 == 0 or tile_n == n

    # Pad the batch so every grid step sees a full tile (sliced off at the end).
    n_pad = _round_up(n, tile_n)
    if n_pad != n:
        x = jnp.pad(x, ((0, n_pad - n), (0, 0)))

    w, b = folded["w"], folded["b"]
    const = lambda i: (0, 0)   # weights: same block every step -> VMEM-resident

    out = pl.pallas_call(
        mlp_multi_kernel,
        out_shape=jax.ShapeDtypeStruct((n_pad, OUT_DIM), jnp.float32),
        grid=(n_pad // tile_n,),
        in_specs=[
            pl.BlockSpec((tile_n, IN_DIM), lambda i: (i, 0)),   # x (pipelined)
            pl.BlockSpec((IN_DIM, OUT_DIM), const),             # W_total (2304, 2)
            pl.BlockSpec((1, OUT_DIM), const),                  # b_total (1, 2)
        ],
        out_specs=pl.BlockSpec((tile_n, OUT_DIM), lambda i: (i, 0)),
        compiler_params=pltpu.CompilerParams(
            dimension_semantics=("parallel",),   # v7x: shard batch across 2 TCs
            vmem_limit_bytes=32 << 20,           # ~19 MiB needed at tile 1024
        ),
    )(x, w, b)

    return out[:n] if n_pad != n else out


# ---------------------------------------------------------------------------
# Parameter construction (PyTorch-shaped) and host-side algebraic folding.
# ---------------------------------------------------------------------------
def init_params(key):
    """Synthetic params mirroring the PyTorch module.  Linear weights stored
    transposed ((in, out)) so the math is x @ W.  Vectors kept as (1, F)."""
    ks = jax.random.split(key, 8)

    def lin(k, fan_in, fan_out):
        bound = 1.0 / jnp.sqrt(jnp.float32(fan_in))
        kw, kb = jax.random.split(k)
        w = jax.random.uniform(kw, (fan_in, fan_out), jnp.float32, -bound, bound)
        b = jax.random.uniform(kb, (1, fan_out), jnp.float32, -bound, bound)
        return w, b

    w1, b1 = lin(ks[0], IN_DIM, H1)
    w2, b2 = lin(ks[1], H1, H2)
    w3, b3 = lin(ks[2], H2, H3)
    w4, b4 = lin(ks[3], H3, OUT_DIM)

    def bn(k, f):
        km, kv = jax.random.split(k)
        gamma = jnp.ones((1, f), jnp.float32)
        beta = jnp.zeros((1, f), jnp.float32)
        mean = 0.1 * jax.random.normal(km, (1, f), jnp.float32)
        var = jnp.abs(jax.random.normal(kv, (1, f), jnp.float32)) + 0.5
        return gamma, beta, mean, var

    g1, be1, m1, v1 = bn(ks[4], H1)
    g2, be2, m2, v2 = bn(ks[5], H2)

    return dict(w1=w1, b1=b1, g1=g1, be1=be1, m1=m1, v1=v1,
                w2=w2, b2=b2, g2=g2, be2=be2, m2=m2, v2=v2,
                w3=w3, b3=b3, w4=w4, b4=b4)


def fold_params(p):
    """Fold eval-mode BN into the preceding Linears and collapse the entire
    (purely affine) network into one (2304, 2) weight + (1, 2) bias.
    Exact up to float rounding."""
    s1 = p["g1"] * jax.lax.rsqrt(p["v1"] + BN_EPS)            # (1, H1)
    w1 = p["w1"] * s1
    b1 = (p["b1"] - p["m1"]) * s1 + p["be1"]

    s2 = p["g2"] * jax.lax.rsqrt(p["v2"] + BN_EPS)            # (1, H2)
    w2 = p["w2"] * s2
    b2 = (p["b2"] - p["m2"]) * s2 + p["be2"]

    w34 = p["w3"] @ p["w4"]                                   # (40, 2)
    b34 = p["b3"] @ p["w4"] + p["b4"]                         # (1, 2)

    w_total = (w1 @ w2) @ w34                                 # (2304, 2)
    b_total = (b1 @ w2 + b2) @ w34 + b34                      # (1, 2)

    return dict(w=w_total.astype(jnp.float32),
                b=b_total.astype(jnp.float32))


def reference_forward(x, p):
    """Pure-JAX, un-folded f32 reference (mirrors the PyTorch eval forward)."""
    h = x @ p["w1"] + p["b1"]
    h = (h - p["m1"]) * jax.lax.rsqrt(p["v1"] + BN_EPS) * p["g1"] + p["be1"]
    h = h @ p["w2"] + p["b2"]
    h = (h - p["m2"]) * jax.lax.rsqrt(p["v2"] + BN_EPS) * p["g2"] + p["be2"]
    h = h @ p["w3"] + p["b3"]
    logits = h @ p["w4"] + p["b4"]
    return jax.nn.softmax(logits, axis=-1)


if __name__ == "__main__":
    key = jax.random.PRNGKey(0)
    kp, kx = jax.random.split(key)
    params = init_params(kp)
    folded = fold_params(params)

    # --- run 1: small batch, single block ---
    N = 8
    x = jax.random.normal(kx, (N, IN_DIM), jnp.float32)
    out = jax.block_until_ready(mlp_multi_forward(x, folded))
    ref = reference_forward(x, params)
    assert out.shape == (N, OUT_DIM)
    assert jnp.allclose(out, ref, atol=1e-4, rtol=1e-4), "folded kernel vs reference"
    assert jnp.allclose(jnp.sum(out, axis=-1), jnp.ones((N,)), atol=1e-5)

    # --- run 2: awkward batch size -> padding + 2-step pipelined grid ---
    N2 = 53
    x2 = jax.random.normal(jax.random.PRNGKey(1), (N2, IN_DIM), jnp.float32)
    out2 = jax.block_until_ready(mlp_multi_forward(x2, folded))
    ref2 = reference_forward(x2, params)
    assert out2.shape == (N2, OUT_DIM)
    assert jnp.allclose(out2, ref2, atol=1e-4, rtol=1e-4), "padded/tiled mismatch"

    # --- run 3: explicit small tile (exercises multi-step grid path) ---
    out3 = jax.block_until_ready(mlp_multi_forward(x2, folded, tile_n=16))
    assert jnp.allclose(out3, ref2, atol=1e-4, rtol=1e-4), "tile_n=16 mismatch"

    print("KERNEL_OK")
</pallas_src>

<mosaic_0001>
module attributes {stable_mosaic.version = 11 : i64} {
  func.func @mlp_multi_kernel(%arg0: i32, %arg1: memref<8x2304xf32, #tpu.memory_space<vmem>>, %arg2: memref<2304x2xf32, #tpu.memory_space<vmem>>, %arg3: memref<1x2xf32, #tpu.memory_space<vmem>>, %arg4: memref<8x2xf32, #tpu.memory_space<vmem>>) attributes {dimension_semantics = [#tpu.dimension_semantics<parallel>], iteration_bounds = array<i64: 1>, scalar_prefetch = 0 : i64, scratch_operands = 0 : i64, tpu.core_type = #tpu.core_type<tc>, window_params = [{transform_indices = @transform_0, window_bounds = array<i64: 8, 2304>}, {pipeline_mode = #tpu.pipeline_mode<synchronous>, transform_indices = @transform_1, window_bounds = array<i64: 2304, 2>}, {pipeline_mode = #tpu.pipeline_mode<synchronous>, transform_indices = @transform_2, window_bounds = array<i64: 1, 2>}, {transform_indices = @transform_3, window_bounds = array<i64: 8, 2>}]} {
    %c0 = arith.constant 0 : index
    %c0_0 = arith.constant 0 : index
    %0 = vector.load %arg1[%c0, %c0_0] : memref<8x2304xf32, #tpu.memory_space<vmem>>, vector<8x2304xf32>
    %c0_1 = arith.constant 0 : index
    %c0_2 = arith.constant 0 : index
    %1 = vector.load %arg2[%c0_1, %c0_2] : memref<2304x2xf32, #tpu.memory_space<vmem>>, vector<2304x2xf32>
    %cst = arith.constant dense<0.000000e+00> : vector<8x2xf32>
    %2 = tpu.matmul %0, %1, %cst {dimension_numbers = #tpu.dot_dimension_numbers<[1], [0], [0], [1], [0, 0, 1, 1], [], []>} : vector<8x2304xf32>, vector<2304x2xf32>, vector<8x2xf32> -> vector<8x2xf32>
    %c0_3 = arith.constant 0 : index
    %c0_4 = arith.constant 0 : index
    %3 = vector.load %arg3[%c0_3, %c0_4] : memref<1x2xf32, #tpu.memory_space<vmem>>, vector<1x2xf32>
    %4 = vector.broadcast %3 : vector<1x2xf32> to vector<8x2xf32>
    %5 = arith.addf %2, %4 : vector<8x2xf32>
    %6 = vector.extract_strided_slice %5 {offsets = [0, 0], sizes = [8, 1], strides = [1, 1]} : vector<8x2xf32> to vector<8x1xf32>
    %7 = vector.extract_strided_slice %5 {offsets = [0, 1], sizes = [8, 1], strides = [1, 1]} : vector<8x2xf32> to vector<8x1xf32>
    %8 = arith.subf %6, %7 : vector<8x1xf32>
    %9 = arith.negf %8 : vector<8x1xf32>
    %10 = math.exp %9 : vector<8x1xf32>
    %cst_5 = arith.constant 1.000000e+00 : f32
    %11 = vector.broadcast %cst_5 : f32 to vector<8x1xf32>
    %12 = arith.addf %11, %10 : vector<8x1xf32>
    %13 = arith.divf %11, %12 : vector<8x1xf32>
    %cst_6 = arith.constant 1.000000e+00 : f32
    %14 = vector.broadcast %cst_6 : f32 to vector<8x1xf32>
    %15 = arith.subf %14, %13 : vector<8x1xf32>
    %16 = tpu.concatenate %13, %15 in 1 : vector<8x1xf32>, vector<8x1xf32> -> vector<8x2xf32>
    %c0_7 = arith.constant 0 : index
    %c0_8 = arith.constant 0 : index
    %17 = vector.load %arg4[%c0_7, %c0_8] : memref<8x2xf32, #tpu.memory_space<vmem>>, vector<8x2xf32>
    tpu.vector_store %arg4[%c0_7, %c0_8], %16 {strides = array<i32>} : memref<8x2xf32, #tpu.memory_space<vmem>>, vector<8x2xf32>,
    return
  }
  func.func @transform_0(%arg0: i32) -> (i32, i32) {
    %c0_i32 = arith.constant 0 : i32
    %c0_i32_0 = arith.constant 0 : i32
    return %arg0, %c0_i32 : i32, i32
  }
  func.func @transform_1(%arg0: i32) -> (i32, i32) {
    %c0_i32 = arith.constant 0 : i32
    %c0_i32_0 = arith.constant 0 : i32
    %c0_i32_1 = arith.constant 0 : i32
    return %c0_i32, %c0_i32_0 : i32, i32
  }
  func.func @transform_2(%arg0: i32) -> (i32, i32) {
    %c0_i32 = arith.constant 0 : i32
    %c0_i32_0 = arith.constant 0 : i32
    %c0_i32_1 = arith.constant 0 : i32
    return %c0_i32, %c0_i32_0 : i32, i32
  }
  func.func @transform_3(%arg0: i32) -> (i32, i32) {
    %c0_i32 = arith.constant 0 : i32
    %c0_i32_0 = arith.constant 0 : i32
    return %arg0, %c0_i32 : i32, i32
  }
}

</mosaic_0001>

<llo_original>
// kernel: tpu_custom_call.1
$region0: #{tpu_custom_call.1}
  #allocation0 [shape = 'u32[]', space=smem, size = 0x4, offset = 0x4, fixed_abs, tag = 'smem constant byte address 0x4 - core index']
  #allocation1 [shape = 'u32[144,128]{1,0:T(1,128)}', space=vmem, size = 0x12000, scoped, tag = 'internal scratch']
  %s0 = inlined_call_operand.vmem [shape: f32[8,2304], index: 0, kind: input, shape index: {}]
  %s1 = inlined_call_operand.vmem [shape: f32[2304,2], index: 1, kind: input, shape index: {}]
  %s2 = inlined_call_operand.vmem [shape: f32[1,2], index: 2, kind: input, shape index: {}]
  %s3 = inlined_call_operand.vmem [shape: f32[8,2], index: 3, kind: output, shape index: {}]
  %s4 = sld [smem:[#allocation0]]
  $region22: #{tpu_custom_call.1} parent=0
    _
  %s6 = ssub.s32 1, %s4
  %s7 = scalar_select 0, %s6, %s4
  // Predicated region
  $region2: #{tpu_custom_call.1} parent=0 // pred_check
    _
  $region3: #{tpu_custom_call.1} parent=0 // pred_check_branch
    %9 = sbr.rel (0) target = $region5
  $region4: #{tpu_custom_call.1} parent=0 // pred_region
    _
  $region5: #{tpu_custom_call.1} parent=0 // pred_fallthru
    _
  // Predicated region
  $region6: #{tpu_custom_call.1} parent=0 // pred_check
    _
  $region7: #{tpu_custom_call.1} parent=0 // pred_check_branch
    %11 = sbr.rel (0) target = $region9
  $region8: #{tpu_custom_call.1} parent=0 // pred_region
    _
  $region9: #{tpu_custom_call.1} parent=0 // pred_fallthru
    _
  // Predicated region
  $region10: #{tpu_custom_call.1} parent=0 // pred_check
    _
  $region11: #{tpu_custom_call.1} parent=0 // pred_check_branch
    %13 = sbr.rel (0) target = $region13
  $region12: #{tpu_custom_call.1} parent=0 // pred_region
    _
  $region13: #{tpu_custom_call.1} parent=0 // pred_fallthru
    _
  %v14 = vld [vmem:[%s0] sm:$0xff]
  %v15 = vld [vmem:[%s0 + $0x8] sm:$0xff]
  %v16 = vld [vmem:[%s0 + $0x10] sm:$0xff]
  %v17 = vld [vmem:[%s0 + $0x18] sm:$0xff]
  %v18 = vld [vmem:[%s0 + $0x20] sm:$0xff]
  %v19 = vld [vmem:[%s0 + $0x28] sm:$0xff]
  %v20 = vld [vmem:[%s0 + $0x30] sm:$0xff]
  %v21 = vld [vmem:[%s0 + $0x38] sm:$0xff]
  %v22 = vld [vmem:[%s0 + $0x40] sm:$0xff]
  %v23 = vld [vmem:[%s0 + $0x48] sm:$0xff]
  %v24 = vld [vmem:[%s0 + $0x50] sm:$0xff]
  %v25 = vld [vmem:[%s0 + $0x58] sm:$0xff]
  %v26 = vld [vmem:[%s0 + $0x60] sm:$0xff]
  %v27 = vld [vmem:[%s0 + $0x68] sm:$0xff]
  %v28 = vld [vmem:[%s0 + $0x70] sm:$0xff]
  %v29 = vld [vmem:[%s0 + $0x78] sm:$0xff]
  %v30 = vld [vmem:[%s0 + $0x80] sm:$0xff]
  %v31 = vld [vmem:[%s0 + $0x88] sm:$0xff]
  %v32 = vld [vmem:[%s1] sm:$0xff]
  %v33 = vld [vmem:[%s1 + $0x8] sm:$0xff]
  %v34 = vld [vmem:[%s1 + $0x10] sm:$0xff]
  %v35 = vld [vmem:[%s1 + $0x18] sm:$0xff]
  %v36 = vld [vmem:[%s1 + $0x20] sm:$0xff]
  %v37 = vld [vmem:[%s1 + $0x28] sm:$0xff]
  %v38 = vld [vmem:[%s1 + $0x30] sm:$0xff]
  %v39 = vld [vmem:[%s1 + $0x38] sm:$0xff]
  %v40 = vld [vmem:[%s1 + $0x40] sm:$0xff]
  %v41 = vld [vmem:[%s1 + $0x48] sm:$0xff]
  %v42 = vld [vmem:[%s1 + $0x50] sm:$0xff]
  %v43 = vld [vmem:[%s1 + $0x58] sm:$0xff]
  %v44 = vld [vmem:[%s1 + $0x60] sm:$0xff]
  %v45 = vld [vmem:[%s1 + $0x68] sm:$0xff]
  %v46 = vld [vmem:[%s1 + $0x70] sm:$0xff]
  %v47 = vld [vmem:[%s1 + $0x78] sm:$0xff]
  %v48 = vld [vmem:[%s1 + $0x80] sm:$0xff]
  %v49 = vld [vmem:[%s1 + $0x88] sm:$0xff]
  %v50 = vld [vmem:[%s1 + $0x90] sm:$0xff]
  %v51 = vld [vmem:[%s1 + $0x98] sm:$0xff]
  %v52 = vld [vmem:[%s1 + $0xa0] sm:$0xff]
  %v53 = vld [vmem:[%s1 + $0xa8] sm:$0xff]
  %v54 = vld [vmem:[%s1 + $0xb0] sm:$0xff]
  %v55 = vld [vmem:[%s1 + $0xb8] sm:$0xff]
  %v56 = vld [vmem:[%s1 + $0xc0] sm:$0xff]
  %v57 = vld [vmem:[%s1 + $0xc8] sm:$0xff]
  %v58 = vld [vmem:[%s1 + $0xd0] sm:$0xff]
  %v59 = vld [vmem:[%s1 + $0xd8] sm:$0xff]
  %v60 = vld [vmem:[%s1 + $0xe0] sm:$0xff]
  %v61 = vld [vmem:[%s1 + $0xe8] sm:$0xff]
  %v62 = vld [vmem:[%s1 + $0xf0] sm:$0xff]
  %v63 = vld [vmem:[%s1 + $0xf8] sm:$0xff]
  %v64 = vld [vmem:[%s1 + $0x100] sm:$0xff]
  %v65 = vld [vmem:[%s1 + $0x108] sm:$0xff]
  %v66 = vld [vmem:[%s1 + $0x110] sm:$0xff]
  %v67 = vld [vmem:[%s1 + $0x118] sm:$0xff]
  %v68 = vld [vmem:[%s1 + $0x120] sm:$0xff]
  %v69 = vld [vmem:[%s1 + $0x128] sm:$0xff]
  %v70 = vld [vmem:[%s1 + $0x130] sm:$0xff]
  %v71 = vld [vmem:[%s1 + $0x138] sm:$0xff]
  %v72 = vld [vmem:[%s1 + $0x140] sm:$0xff]
  %v73 = vld [vmem:[%s1 + $0x148] sm:$0xff]
  %v74 = vld [vmem:[%s1 + $0x150] sm:$0xff]
  %v75 = vld [vmem:[%s1 + $0x158] sm:$0xff]
  %v76 = vld [vmem:[%s1 + $0x160] sm:$0xff]
  %v77 = vld [vmem:[%s1 + $0x168] sm:$0xff]
  %v78 = vld [vmem:[%s1 + $0x170] sm:$0xff]
  %v79 = vld [vmem:[%s1 + $0x178] sm:$0xff]
  %v80 = vld [vmem:[%s1 + $0x180] sm:$0xff]
  %v81 = vld [vmem:[%s1 + $0x188] sm:$0xff]
  %v82 = vld [vmem:[%s1 + $0x190] sm:$0xff]
  %v83 = vld [vmem:[%s1 + $0x198] sm:$0xff]
  %v84 = vld [vmem:[%s1 + $0x1a0] sm:$0xff]
  %v85 = vld [vmem:[%s1 + $0x1a8] sm:$0xff]
  %v86 = vld [vmem:[%s1 + $0x1b0] sm:$0xff]
  %v87 = vld [vmem:[%s1 + $0x1b8] sm:$0xff]
  %v88 = vld [vmem:[%s1 + $0x1c0] sm:$0xff]
  %v89 = vld [vmem:[%s1 + $0x1c8] sm:$0xff]
  %v90 = vld [vmem:[%s1 + $0x1d0] sm:$0xff]
  %v91 = vld [vmem:[%s1 + $0x1d8] sm:$0xff]
  %v92 = vld [vmem:[%s1 + $0x1e0] sm:$0xff]
  %v93 = vld [vmem:[%s1 + $0x1e8] sm:$0xff]
  %v94 = vld [vmem:[%s1 + $0x1f0] sm:$0xff]
  %v95 = vld [vmem:[%s1 + $0x1f8] sm:$0xff]
  %v96 = vld [vmem:[%s1 + $0x200] sm:$0xff]
  %v97 = vld [vmem:[%s1 + $0x208] sm:$0xff]
  %v98 = vld [vmem:[%s1 + $0x210] sm:$0xff]
  %v99 = vld [vmem:[%s1 + $0x218] sm:$0xff]
  %v100 = vld [vmem:[%s1 + $0x220] sm:$0xff]
  %v101 = vld [vmem:[%s1 + $0x228] sm:$0xff]
  %v102 = vld [vmem:[%s1 + $0x230] sm:$0xff]
  %v103 = vld [vmem:[%s1 + $0x238] sm:$0xff]
  %v104 = vld [vmem:[%s1 + $0x240] sm:$0xff]
  %v105 = vld [vmem:[%s1 + $0x248] sm:$0xff]
  %v106 = vld [vmem:[%s1 + $0x250] sm:$0xff]
  %v107 = vld [vmem:[%s1 + $0x258] sm:$0xff]
  %v108 = vld [vmem:[%s1 + $0x260] sm:$0xff]
  %v109 = vld [vmem:[%s1 + $0x268] sm:$0xff]
  %v110 = vld [vmem:[%s1 + $0x270] sm:$0xff]
  %v111 = vld [vmem:[%s1 + $0x278] sm:$0xff]
  %v112 = vld [vmem:[%s1 + $0x280] sm:$0xff]
  %v113 = vld [vmem:[%s1 + $0x288] sm:$0xff]
  %v114 = vld [vmem:[%s1 + $0x290] sm:$0xff]
  %v115 = vld [vmem:[%s1 + $0x298] sm:$0xff]
  %v116 = vld [vmem:[%s1 + $0x2a0] sm:$0xff]
  %v117 = vld [vmem:[%s1 + $0x2a8] sm:$0xff]
  %v118 = vld [vmem:[%s1 + $0x2b0] sm:$0xff]
  %v119 = vld [vmem:[%s1 + $0x2b8] sm:$0xff]
  %v120 = vld [vmem:[%s1 + $0x2c0] sm:$0xff]
  %v121 = vld [vmem:[%s1 + $0x2c8] sm:$0xff]
  %v122 = vld [vmem:[%s1 + $0x2d0] sm:$0xff]
  %v123 = vld [vmem:[%s1 + $0x2d8] sm:$0xff]
  %v124 = vld [vmem:[%s1 + $0x2e0] sm:$0xff]
  %v125 = vld [vmem:[%s1 + $0x2e8] sm:$0xff]
  %v126 = vld [vmem:[%s1 + $0x2f0] sm:$0xff]
  %v127 = vld [vmem:[%s1 + $0x2f8] sm:$0xff]
  %v128 = vld [vmem:[%s1 + $0x300] sm:$0xff]
  %v129 = vld [vmem:[%s1 + $0x308] sm:$0xff]
  %v130 = vld [vmem:[%s1 + $0x310] sm:$0xff]
  %v131 = vld [vmem:[%s1 + $0x318] sm:$0xff]
  %v132 = vld [vmem:[%s1 + $0x320] sm:$0xff]
  %v133 = vld [vmem:[%s1 + $0x328] sm:$0xff]
  %v134 = vld [vmem:[%s1 + $0x330] sm:$0xff]
  %v135 = vld [vmem:[%s1 + $0x338] sm:$0xff]
  %v136 = vld [vmem:[%s1 + $0x340] sm:$0xff]
  %v137 = vld [vmem:[%s1 + $0x348] sm:$0xff]
  %v138 = vld [vmem:[%s1 + $0x350] sm:$0xff]
  %v139 = vld [vmem:[%s1 + $0x358] sm:$0xff]
  %v140 = vld [vmem:[%s1 + $0x360] sm:$0xff]
  %v141 = vld [vmem:[%s1 + $0x368] sm:$0xff]
  %v142 = vld [vmem:[%s1 + $0x370] sm:$0xff]
  %v143 = vld [vmem:[%s1 + $0x378] sm:$0xff]
  %v144 = vld [vmem:[%s1 + $0x380] sm:$0xff]
  %v145 = vld [vmem:[%s1 + $0x388] sm:$0xff]
  %v146 = vld [vmem:[%s1 + $0x390] sm:$0xff]
  %v147 = vld [vmem:[%s1 + $0x398] sm:$0xff]
  %v148 = vld [vmem:[%s1 + $0x3a0] sm:$0xff]
  %v149 = vld [vmem:[%s1 + $0x3a8] sm:$0xff]
  %v150 = vld [vmem:[%s1 + $0x3b0] sm:$0xff]
  %v151 = vld [vmem:[%s1 + $0x3b8] sm:$0xff]
  %v152 = vld [vmem:[%s1 + $0x3c0] sm:$0xff]
  %v153 = vld [vmem:[%s1 + $0x3c8] sm:$0xff]
  %v154 = vld [vmem:[%s1 + $0x3d0] sm:$0xff]
  %v155 = vld [vmem:[%s1 + $0x3d8] sm:$0xff]
  %v156 = vld [vmem:[%s1 + $0x3e0] sm:$0xff]
  %v157 = vld [vmem:[%s1 + $0x3e8] sm:$0xff]
  %v158 = vld [vmem:[%s1 + $0x3f0] sm:$0xff]
  %v159 = vld [vmem:[%s1 + $0x3f8] sm:$0xff]
  %v160 = vld [vmem:[%s1 + $0x400] sm:$0xff]
  %v161 = vld [vmem:[%s1 + $0x408] sm:$0xff]
  %v162 = vld [vmem:[%s1 + $0x410] sm:$0xff]
  %v163 = vld [vmem:[%s1 + $0x418] sm:$0xff]
  %v164 = vld [vmem:[%s1 + $0x420] sm:$0xff]
  %v165 = vld [vmem:[%s1 + $0x428] sm:$0xff]
  %v166 = vld [vmem:[%s1 + $0x430] sm:$0xff]
  %v167 = vld [vmem:[%s1 + $0x438] sm:$0xff]
  %v168 = vld [vmem:[%s1 + $0x440] sm:$0xff]
  %v169 = vld [vmem:[%s1 + $0x448] sm:$0xff]
  %v170 = vld [vmem:[%s1 + $0x450] sm:$0xff]
  %v171 = vld [vmem:[%s1 + $0x458] sm:$0xff]
  %v172 = vld [vmem:[%s1 + $0x460] sm:$0xff]
  %v173 = vld [vmem:[%s1 + $0x468] sm:$0xff]
  %v174 = vld [vmem:[%s1 + $0x470] sm:$0xff]
  %v175 = vld [vmem:[%s1 + $0x478] sm:$0xff]
  %v176 = vld [vmem:[%s1 + $0x480] sm:$0xff]
  %v177 = vld [vmem:[%s1 + $0x488] sm:$0xff]
  %v178 = vld [vmem:[%s1 + $0x490] sm:$0xff]
  %v179 = vld [vmem:[%s1 + $0x498] sm:$0xff]
  %v180 = vld [vmem:[%s1 + $0x4a0] sm:$0xff]
  %v181 = vld [vmem:[%s1 + $0x4a8] sm:$0xff]
  %v182 = vld [vmem:[%s1 + $0x4b0] sm:$0xff]
  %v183 = vld [vmem:[%s1 + $0x4b8] sm:$0xff]
  %v184 = vld [vmem:[%s1 + $0x4c0] sm:$0xff]
  %v185 = vld [vmem:[%s1 + $0x4c8] sm:$0xff]
  %v186 = vld [vmem:[%s1 + $0x4d0] sm:$0xff]
  %v187 = vld [vmem:[%s1 + $0x4d8] sm:$0xff]
  %v188 = vld [vmem:[%s1 + $0x4e0] sm:$0xff]
  %v189 = vld [vmem:[%s1 + $0x4e8] sm:$0xff]
  %v190 = vld [vmem:[%s1 + $0x4f0] sm:$0xff]
  %v191 = vld [vmem:[%s1 + $0x4f8] sm:$0xff]
  %v192 = vld [vmem:[%s1 + $0x500] sm:$0xff]
  %v193 = vld [vmem:[%s1 + $0x508] sm:$0xff]
  %v194 = vld [vmem:[%s1 + $0x510] sm:$0xff]
  %v195 = vld [vmem:[%s1 + $0x518] sm:$0xff]
  %v196 = vld [vmem:[%s1 + $0x520] sm:$0xff]
  %v197 = vld [vmem:[%s1 + $0x528] sm:$0xff]
  %v198 = vld [vmem:[%s1 + $0x530] sm:$0xff]
  %v199 = vld [vmem:[%s1 + $0x538] sm:$0xff]
  %v200 = vld [vmem:[%s1 + $0x540] sm:$0xff]
  %v201 = vld [vmem:[%s1 + $0x548] sm:$0xff]
  %v202 = vld [vmem:[%s1 + $0x550] sm:$0xff]
  %v203 = vld [vmem:[%s1 + $0x558] sm:$0xff]
  %v204 = vld [vmem:[%s1 + $0x560] sm:$0xff]
  %v205 = vld [vmem:[%s1 + $0x568] sm:$0xff]
  %v206 = vld [vmem:[%s1 + $0x570] sm:$0xff]
  %v207 = vld [vmem:[%s1 + $0x578] sm:$0xff]
  %v208 = vld [vmem:[%s1 + $0x580] sm:$0xff]
  %v209 = vld [vmem:[%s1 + $0x588] sm:$0xff]
  %v210 = vld [vmem:[%s1 + $0x590] sm:$0xff]
  %v211 = vld [vmem:[%s1 + $0x598] sm:$0xff]
  %v212 = vld [vmem:[%s1 + $0x5a0] sm:$0xff]
  %v213 = vld [vmem:[%s1 + $0x5a8] sm:$0xff]
  %v214 = vld [vmem:[%s1 + $0x5b0] sm:$0xff]
  %v215 = vld [vmem:[%s1 + $0x5b8] sm:$0xff]
  %v216 = vld [vmem:[%s1 + $0x5c0] sm:$0xff]
  %v217 = vld [vmem:[%s1 + $0x5c8] sm:$0xff]
  %v218 = vld [vmem:[%s1 + $0x5d0] sm:$0xff]
  %v219 = vld [vmem:[%s1 + $0x5d8] sm:$0xff]
  %v220 = vld [vmem:[%s1 + $0x5e0] sm:$0xff]
  %v221 = vld [vmem:[%s1 + $0x5e8] sm:$0xff]
  %v222 = vld [vmem:[%s1 + $0x5f0] sm:$0xff]
  %v223 = vld [vmem:[%s1 + $0x5f8] sm:$0xff]
  %v224 = vld [vmem:[%s1 + $0x600] sm:$0xff]
  %v225 = vld [vmem:[%s1 + $0x608] sm:$0xff]
  %v226 = vld [vmem:[%s1 + $0x610] sm:$0xff]
  %v227 = vld [vmem:[%s1 + $0x618] sm:$0xff]
  %v228 = vld [vmem:[%s1 + $0x620] sm:$0xff]
  %v229 = vld [vmem:[%s1 + $0x628] sm:$0xff]
  %v230 = vld [vmem:[%s1 + $0x630] sm:$0xff]
  %v231 = vld [vmem:[%s1 + $0x638] sm:$0xff]
  %v232 = vld [vmem:[%s1 + $0x640] sm:$0xff]
  %v233 = vld [vmem:[%s1 + $0x648] sm:$0xff]
  %v234 = vld [vmem:[%s1 + $0x650] sm:$0xff]
  %v235 = vld [vmem:[%s1 + $0x658] sm:$0xff]
  %v236 = vld [vmem:[%s1 + $0x660] sm:$0xff]
  %v237 = vld [vmem:[%s1 + $0x668] sm:$0xff]
  %v238 = vld [vmem:[%s1 + $0x670] sm:$0xff]
  %v239 = vld [vmem:[%s1 + $0x678] sm:$0xff]
  %v240 = vld [vmem:[%s1 + $0x680] sm:$0xff]
  %v241 = vld [vmem:[%s1 + $0x688] sm:$0xff]
  %v242 = vld [vmem:[%s1 + $0x690] sm:$0xff]
  %v243 = vld [vmem:[%s1 + $0x698] sm:$0xff]
  %v244 = vld [vmem:[%s1 + $0x6a0] sm:$0xff]
  %v245 = vld [vmem:[%s1 + $0x6a8] sm:$0xff]
  %v246 = vld [vmem:[%s1 + $0x6b0] sm:$0xff]
  %v247 = vld [vmem:[%s1 + $0x6b8] sm:$0xff]
  %v248 = vld [vmem:[%s1 + $0x6c0] sm:$0xff]
  %v249 = vld [vmem:[%s1 + $0x6c8] sm:$0xff]
  %v250 = vld [vmem:[%s1 + $0x6d0] sm:$0xff]
  %v251 = vld [vmem:[%s1 + $0x6d8] sm:$0xff]
  %v252 = vld [vmem:[%s1 + $0x6e0] sm:$0xff]
  %v253 = vld [vmem:[%s1 + $0x6e8] sm:$0xff]
  %v254 = vld [vmem:[%s1 + $0x6f0] sm:$0xff]
  %v255 = vld [vmem:[%s1 + $0x6f8] sm:$0xff]
  %v256 = vld [vmem:[%s1 + $0x700] sm:$0xff]
  %v257 = vld [vmem:[%s1 + $0x708] sm:$0xff]
  %v258 = vld [vmem:[%s1 + $0x710] sm:$0xff]
  %v259 = vld [vmem:[%s1 + $0x718] sm:$0xff]
  %v260 = vld [vmem:[%s1 + $0x720] sm:$0xff]
  %v261 = vld [vmem:[%s1 + $0x728] sm:$0xff]
  %v262 = vld [vmem:[%s1 + $0x730] sm:$0xff]
  %v263 = vld [vmem:[%s1 + $0x738] sm:$0xff]
  %v264 = vld [vmem:[%s1 + $0x740] sm:$0xff]
  %v265 = vld [vmem:[%s1 + $0x748] sm:$0xff]
  %v266 = vld [vmem:[%s1 + $0x750] sm:$0xff]
  %v267 = vld [vmem:[%s1 + $0x758] sm:$0xff]
  %v268 = vld [vmem:[%s1 + $0x760] sm:$0xff]
  %v269 = vld [vmem:[%s1 + $0x768] sm:$0xff]
  %v270 = vld [vmem:[%s1 + $0x770] sm:$0xff]
  %v271 = vld [vmem:[%s1 + $0x778] sm:$0xff]
  %v272 = vld [vmem:[%s1 + $0x780] sm:$0xff]
  %v273 = vld [vmem:[%s1 + $0x788] sm:$0xff]
  %v274 = vld [vmem:[%s1 + $0x790] sm:$0xff]
  %v275 = vld [vmem:[%s1 + $0x798] sm:$0xff]
  %v276 = vld [vmem:[%s1 + $0x7a0] sm:$0xff]
  %v277 = vld [vmem:[%s1 + $0x7a8] sm:$0xff]
  %v278 = vld [vmem:[%s1 + $0x7b0] sm:$0xff]
  %v279 = vld [vmem:[%s1 + $0x7b8] sm:$0xff]
  %v280 = vld [vmem:[%s1 + $0x7c0] sm:$0xff]
  %v281 = vld [vmem:[%s1 + $0x7c8] sm:$0xff]
  %v282 = vld [vmem:[%s1 + $0x7d0] sm:$0xff]
  %v283 = vld [vmem:[%s1 + $0x7d8] sm:$0xff]
  %v284 = vld [vmem:[%s1 + $0x7e0] sm:$0xff]
  %v285 = vld [vmem:[%s1 + $0x7e8] sm:$0xff]
  %v286 = vld [vmem:[%s1 + $0x7f0] sm:$0xff]
  %v287 = vld [vmem:[%s1 + $0x7f8] sm:$0xff]
  %v288 = vld [vmem:[%s1 + $0x800] sm:$0xff]
  %v289 = vld [vmem:[%s1 + $0x808] sm:$0xff]
  %v290 = vld [vmem:[%s1 + $0x810] sm:$0xff]
  %v291 = vld [vmem:[%s1 + $0x818] sm:$0xff]
  %v292 = vld [vmem:[%s1 + $0x820] sm:$0xff]
  %v293 = vld [vmem:[%s1 + $0x828] sm:$0xff]
  %v294 = vld [vmem:[%s1 + $0x830] sm:$0xff]
  %v295 = vld [vmem:[%s1 + $0x838] sm:$0xff]
  %v296 = vld [vmem:[%s1 + $0x840] sm:$0xff]
  %v297 = vld [vmem:[%s1 + $0x848] sm:$0xff]
  %v298 = vld [vmem:[%s1 + $0x850] sm:$0xff]
  %v299 = vld [vmem:[%s1 + $0x858] sm:$0xff]
  %v300 = vld [vmem:[%s1 + $0x860] sm:$0xff]
  %v301 = vld [vmem:[%s1 + $0x868] sm:$0xff]
  %v302 = vld [vmem:[%s1 + $0x870] sm:$0xff]
  %v303 = vld [vmem:[%s1 + $0x878] sm:$0xff]
  %v304 = vld [vmem:[%s1 + $0x880] sm:$0xff]
  %v305 = vld [vmem:[%s1 + $0x888] sm:$0xff]
  %v306 = vld [vmem:[%s1 + $0x890] sm:$0xff]
  %v307 = vld [vmem:[%s1 + $0x898] sm:$0xff]
  %v308 = vld [vmem:[%s1 + $0x8a0] sm:$0xff]
  %v309 = vld [vmem:[%s1 + $0x8a8] sm:$0xff]
  %v310 = vld [vmem:[%s1 + $0x8b0] sm:$0xff]
  %v311 = vld [vmem:[%s1 + $0x8b8] sm:$0xff]
  %v312 = vld [vmem:[%s1 + $0x8c0] sm:$0xff]
  %v313 = vld [vmem:[%s1 + $0x8c8] sm:$0xff]
  %v314 = vld [vmem:[%s1 + $0x8d0] sm:$0xff]
  %v315 = vld [vmem:[%s1 + $0x8d8] sm:$0xff]
  %v316 = vld [vmem:[%s1 + $0x8e0] sm:$0xff]
  %v317 = vld [vmem:[%s1 + $0x8e8] sm:$0xff]
  %v318 = vld [vmem:[%s1 + $0x8f0] sm:$0xff]
  %v319 = vld [vmem:[%s1 + $0x8f8] sm:$0xff]
  %v320 = vld [vmem:[%s2] sm:$0x1]
  %v322 = vlaneseq
  %v323 = vshrl.u32 %v322, 7
  %v324 = vsub.s32 0, %v323
  %v325 = vrot.slane %v320, %v324
  %327 = vmatprep.subr.mxu0 0.0
  %328 = vmatpush1.msra.mxu0 %v32
  %329 = vmatprep.subr.mxu0 0.0
  %330 = vmatpush1.msra.mxu0 %v33
  %331 = vmatprep.subr.mxu0 0.0
  %332 = vmatpush1.msra.mxu0 %v34
  %333 = vmatprep.subr.mxu0 0.0
  %334 = vmatpush1.msra.mxu0 %v35
  %335 = vmatprep.subr.mxu0 0.0
  %336 = vmatpush1.msra.mxu0 %v36
  %337 = vmatprep.subr.mxu0 0.0
  %338 = vmatpush1.msra.mxu0 %v37
  %339 = vmatprep.subr.mxu0 0.0
  %340 = vmatpush1.msra.mxu0 %v38
  %341 = vmatprep.subr.mxu0 0.0
  %342 = vmatpush1.msra.mxu0 %v39
  %343 = vmatprep.subr.mxu0 0.0
  %344 = vmatpush1.msra.mxu0 %v40
  %345 = vmatprep.subr.mxu0 0.0
  %346 = vmatpush1.msra.mxu0 %v41
  %347 = vmatprep.subr.mxu0 0.0
  %348 = vmatpush1.msra.mxu0 %v42
  %349 = vmatprep.subr.mxu0 0.0
  %350 = vmatpush1.msra.mxu0 %v43
  %351 = vmatprep.subr.mxu0 0.0
  %352 = vmatpush1.msra.mxu0 %v44
  %353 = vmatprep.subr.mxu0 0.0
  %354 = vmatpush1.msra.mxu0 %v45
  %355 = vmatprep.subr.mxu0 0.0
  %356 = vmatpush1.msra.mxu0 %v46
  %357 = vmatprep.subr.mxu0 0.0
  %358 = vmatpush1.msra.mxu0 %v47
  %359 = vmatprep.subr.mxu0 0.0
  %360 = vmatpush1.msra.mxu0 %v48
  %361 = vmatprep.subr.mxu0 0.0
  %362 = vmatpush1.msra.mxu0 %v49
  %363 = vmatprep.subr.mxu0 0.0
  %364 = vmatpush1.msra.mxu0 %v50
  %365 = vmatprep.subr.mxu0 0.0
  %366 = vmatpush1.msra.mxu0 %v51
  %367 = vmatprep.subr.mxu0 0.0
  %368 = vmatpush1.msra.mxu0 %v52
  %369 = vmatprep.subr.mxu0 0.0
  %370 = vmatpush1.msra.mxu0 %v53
  %371 = vmatprep.subr.mxu0 0.0
  %372 = vmatpush1.msra.mxu0 %v54
  %373 = vmatprep.subr.mxu0 0.0
  %374 = vmatpush1.msra.mxu0 %v55
  %375 = vmatprep.subr.mxu0 0.0
  %376 = vmatpush1.msra.mxu0 %v56
  %377 = vmatprep.subr.mxu0 0.0
  %378 = vmatpush1.msra.mxu0 %v57
  %379 = vmatprep.subr.mxu0 0.0
  %380 = vmatpush1.msra.mxu0 %v58
  %381 = vmatprep.subr.mxu0 0.0
  %382 = vmatpush1.msra.mxu0 %v59
  %383 = vmatprep.subr.mxu0 0.0
  %384 = vmatpush1.msra.mxu0 %v60
  %385 = vmatprep.subr.mxu0 0.0
  %386 = vmatpush1.msra.mxu0 %v61
  %387 = vmatprep.subr.mxu0 0.0
  %388 = vmatpush1.msra.mxu0 %v62
  %389 = vmatprep.subr.mxu0 0.0
  %390 = vmatpush1.msra.mxu0 %v63
  %391 = vmatprep.mubr.f32.mxu0 %v15
  %392 = vmatmul.mubr.f32.gmra.mrb[0].mxu0 %v14
  %v393 = vpop.f32.mrb[0].mxu0
  %v394 = vadd.f32 %v325, %v393
  %v395 = vpop.f32.mrb[0].mxu0
  %396 = vdwg.mxu0
  %397 = vmatprep.subr.mxu0 0.0
  %398 = vmatpush1.msra.mxu0 %v64
  %399 = vmatprep.subr.mxu0 0.0
  %400 = vmatpush1.msra.mxu0 %v65
  %401 = vmatprep.subr.mxu0 0.0
  %402 = vmatpush1.msra.mxu0 %v66
  %403 = vmatprep.subr.mxu0 0.0
  %404 = vmatpush1.msra.mxu0 %v67
  %405 = vmatprep.subr.mxu0 0.0
  %406 = vmatpush1.msra.mxu0 %v68
  %407 = vmatprep.subr.mxu0 0.0
  %408 = vmatpush1.msra.mxu0 %v69
  %409 = vmatprep.subr.mxu0 0.0
  %410 = vmatpush1.msra.mxu0 %v70
  %411 = vmatprep.subr.mxu0 0.0
  %412 = vmatpush1.msra.mxu0 %v71
  %413 = vmatprep.subr.mxu0 0.0
  %414 = vmatpush1.msra.mxu0 %v72
  %415 = vmatprep.subr.mxu0 0.0
  %416 = vmatpush1.msra.mxu0 %v73
  %417 = vmatprep.subr.mxu0 0.0
  %418 = vmatpush1.msra.mxu0 %v74
  %419 = vmatprep.subr.mxu0 0.0
  %420 = vmatpush1.msra.mxu0 %v75
  %421 = vmatprep.subr.mxu0 0.0
  %422 = vmatpush1.msra.mxu0 %v76
  %423 = vmatprep.subr.mxu0 0.0
  %424 = vmatpush1.msra.mxu0 %v77
  %425 = vmatprep.subr.mxu0 0.0
  %426 = vmatpush1.msra.mxu0 %v78
  %427 = vmatprep.subr.mxu0 0.0
  %428 = vmatpush1.msra.mxu0 %v79
  %429 = vmatprep.subr.mxu0 0.0
  %430 = vmatpush1.msra.mxu0 %v80
  %431 = vmatprep.subr.mxu0 0.0
  %432 = vmatpush1.msra.mxu0 %v81
  %433 = vmatprep.subr.mxu0 0.0
  %434 = vmatpush1.msra.mxu0 %v82
  %435 = vmatprep.subr.mxu0 0.0
  %436 = vmatpush1.msra.mxu0 %v83
  %437 = vmatprep.subr.mxu0 0.0
  %438 = vmatpush1.msra.mxu0 %v84
  %439 = vmatprep.subr.mxu0 0.0
  %440 = vmatpush1.msra.mxu0 %v85
  %441 = vmatprep.subr.mxu0 0.0
  %442 = vmatpush1.msra.mxu0 %v86
  %443 = vmatprep.subr.mxu0 0.0
  %444 = vmatpush1.msra.mxu0 %v87
  %445 = vmatprep.subr.mxu0 0.0
  %446 = vmatpush1.msra.mxu0 %v88
  %447 = vmatprep.subr.mxu0 0.0
  %448 = vmatpush1.msra.mxu0 %v89
  %449 = vmatprep.subr.mxu0 0.0
  %450 = vmatpush1.msra.mxu0 %v90
  %451 = vmatprep.subr.mxu0 0.0
  %452 = vmatpush1.msra.mxu0 %v91
  %453 = vmatprep.subr.mxu0 0.0
  %454 = vmatpush1.msra.mxu0 %v92
  %455 = vmatprep.subr.mxu0 0.0
  %456 = vmatpush1.msra.mxu0 %v93
  %457 = vmatprep.subr.mxu0 0.0
  %458 = vmatpush1.msra.mxu0 %v94
  %459 = vmatprep.subr.mxu0 0.0
  %460 = vmatpush1.msra.mxu0 %v95
  %461 = vmatprep.mubr.f32.mxu0 %v17
  %462 = vmatmul.mubr.f32.gmra.mrb[0].mxu0 %v16
  %v463 = vpop.f32.mrb[0].mxu0
  %v464 = vadd.f32 %v394, %v463
  %v465 = vpop.f32.mrb[0].mxu0
  %466 = vdwg.mxu0
  %467 = vmatprep.subr.mxu0 0.0
  %468 = vmatpush1.msra.mxu0 %v96
  %469 = vmatprep.subr.mxu0 0.0
  %470 = vmatpush1.msra.mxu0 %v97
  %471 = vmatprep.subr.mxu0 0.0
  %472 = vmatpush1.msra.mxu0 %v98
  %473 = vmatprep.subr.mxu0 0.0
  %474 = vmatpush1.msra.mxu0 %v99
  %475 = vmatprep.subr.mxu0 0.0
  %476 = vmatpush1.msra.mxu0 %v100
  %477 = vmatprep.subr.mxu0 0.0
  %478 = vmatpush1.msra.mxu0 %v101
  %479 = vmatprep.subr.mxu0 0.0
  %480 = vmatpush1.msra.mxu0 %v102
  %481 = vmatprep.subr.mxu0 0.0
  %482 = vmatpush1.msra.mxu0 %v103
  %483 = vmatprep.subr.mxu0 0.0
  %484 = vmatpush1.msra.mxu0 %v104
  %485 = vmatprep.subr.mxu0 0.0
  %486 = vmatpush1.msra.mxu0 %v105
  %487 = vmatprep.subr.mxu0 0.0
  %488 = vmatpush1.msra.mxu0 %v106
  %489 = vmatprep.subr.mxu0 0.0
  %490 = vmatpush1.msra.mxu0 %v107
  %491 = vmatprep.subr.mxu0 0.0
  %492 = vmatpush1.msra.mxu0 %v108
  %493 = vmatprep.subr.mxu0 0.0
  %494 = vmatpush1.msra.mxu0 %v109
  %495 = vmatprep.subr.mxu0 0.0
  %496 = vmatpush1.msra.mxu0 %v110
  %497 = vmatprep.subr.mxu0 0.0
  %498 = vmatpush1.msra.mxu0 %v111
  %499 = vmatprep.subr.mxu0 0.0
  %500 = vmatpush1.msra.mxu0 %v112
  %501 = vmatprep.subr.mxu0 0.0
  %502 = vmatpush1.msra.mxu0 %v113
  %503 = vmatprep.subr.mxu0 0.0
  %504 = vmatpush1.msra.mxu0 %v114
  %505 = vmatprep.subr.mxu0 0.0
  %506 = vmatpush1.msra.mxu0 %v115
  %507 = vmatprep.subr.mxu0 0.0
  %508 = vmatpush1.msra.mxu0 %v116
  %509 = vmatprep.subr.mxu0 0.0
  %510 = vmatpush1.msra.mxu0 %v117
  %511 = vmatprep.subr.mxu0 0.0
  %512 = vmatpush1.msra.mxu0 %v118
  %513 = vmatprep.subr.mxu0 0.0
  %514 = vmatpush1.msra.mxu0 %v119
  %515 = vmatprep.subr.mxu0 0.0
  %516 = vmatpush1.msra.mxu0 %v120
  %517 = vmatprep.subr.mxu0 0.0
  %518 = vmatpush1.msra.mxu0 %v121
  %519 = vmatprep.subr.mxu0 0.0
  %520 = vmatpush1.msra.mxu0 %v122
  %521 = vmatprep.subr.mxu0 0.0
  %522 = vmatpush1.msra.mxu0 %v123
  %523 = vmatprep.subr.mxu0 0.0
  %524 = vmatpush1.msra.mxu0 %v124
  %525 = vmatprep.subr.mxu0 0.0
  %526 = vmatpush1.msra.mxu0 %v125
  %527 = vmatprep.subr.mxu0 0.0
  %528 = vmatpush1.msra.mxu0 %v126
  %529 = vmatprep.subr.mxu0 0.0
  %530 = vmatpush1.msra.mxu0 %v127
  %531 = vmatprep.mubr.f32.mxu0 %v19
  %532 = vmatmul.mubr.f32.gmra.mrb[0].mxu0 %v18
  %v533 = vpop.f32.mrb[0].mxu0
  %v534 = vadd.f32 %v464, %v533
  %v535 = vpop.f32.mrb[0].mxu0
  %536 = vdwg.mxu0
  %537 = vmatprep.subr.mxu0 0.0
  %538 = vmatpush1.msra.mxu0 %v128
  %539 = vmatprep.subr.mxu0 0.0
  %540 = vmatpush1.msra.mxu0 %v129
  %541 = vmatprep.subr.mxu0 0.0
  %542 = vmatpush1.msra.mxu0 %v130
  %543 = vmatprep.subr.mxu0 0.0
  %544 = vmatpush1.msra.mxu0 %v131
  %545 = vmatprep.subr.mxu0 0.0
  %546 = vmatpush1.msra.mxu0 %v132
  %547 = vmatprep.subr.mxu0 0.0
  %548 = vmatpush1.msra.mxu0 %v133
  %549 = vmatprep.subr.mxu0 0.0
  %550 = vmatpush1.msra.mxu0 %v134
  %551 = vmatprep.subr.mxu0 0.0
  %552 = vmatpush1.msra.mxu0 %v135
  %553 = vmatprep.subr.mxu0 0.0
  %554 = vmatpush1.msra.mxu0 %v136
  %555 = vmatprep.subr.mxu0 0.0
  %556 = vmatpush1.msra.mxu0 %v137
  %557 = vmatprep.subr.mxu0 0.0
  %558 = vmatpush1.msra.mxu0 %v138
  %559 = vmatprep.subr.mxu0 0.0
  %560 = vmatpush1.msra.mxu0 %v139
  %561 = vmatprep.subr.mxu0 0.0
  %562 = vmatpush1.msra.mxu0 %v140
  %563 = vmatprep.subr.mxu0 0.0
  %564 = vmatpush1.msra.mxu0 %v141
  %565 = vmatprep.subr.mxu0 0.0
  %566 = vmatpush1.msra.mxu0 %v142
  %567 = vmatprep.subr.mxu0 0.0
  %568 = vmatpush1.msra.mxu0 %v143
  %569 = vmatprep.subr.mxu0 0.0
  %570 = vmatpush1.msra.mxu0 %v144
  %571 = vmatprep.subr.mxu0 0.0
  %572 = vmatpush1.msra.mxu0 %v145
  %573 = vmatprep.subr.mxu0 0.0
  %574 = vmatpush1.msra.mxu0 %v146
  %575 = vmatprep.subr.mxu0 0.0
  %576 = vmatpush1.msra.mxu0 %v147
  %577 = vmatprep.subr.mxu0 0.0
  %578 = vmatpush1.msra.mxu0 %v148
  %579 = vmatprep.subr.mxu0 0.0
  %580 = vmatpush1.msra.mxu0 %v149
  %581 = vmatprep.subr.mxu0 0.0
  %582 = vmatpush1.msra.mxu0 %v150
  %583 = vmatprep.subr.mxu0 0.0
  %584 = vmatpush1.msra.mxu0 %v151
  %585 = vmatprep.subr.mxu0 0.0
  %586 = vmatpush1.msra.mxu0 %v152
  %587 = vmatprep.subr.mxu0 0.0
  %588 = vmatpush1.msra.mxu0 %v153
  %589 = vmatprep.subr.mxu0 0.0
  %590 = vmatpush1.msra.mxu0 %v154
  %591 = vmatprep.subr.mxu0 0.0
  %592 = vmatpush1.msra.mxu0 %v155
  %593 = vmatprep.subr.mxu0 0.0
  %594 = vmatpush1.msra.mxu0 %v156
  %595 = vmatprep.subr.mxu0 0.0
  %596 = vmatpush1.msra.mxu0 %v157
  %597 = vmatprep.subr.mxu0 0.0
  %598 = vmatpush1.msra.mxu0 %v158
  %599 = vmatprep.subr.mxu0 0.0
  %600 = vmatpush1.msra.mxu0 %v159
  %601 = vmatprep.mubr.f32.mxu0 %v21
  %602 = vmatmul.mubr.f32.gmra.mrb[0].mxu0 %v20
  %v603 = vpop.f32.mrb[0].mxu0
  %v604 = vadd.f32 %v534, %v603
  %v605 = vpop.f32.mrb[0].mxu0
  %606 = vdwg.mxu0
  %607 = vmatprep.subr.mxu0 0.0
  %608 = vmatpush1.msra.mxu0 %v160
  %609 = vmatprep.subr.mxu0 0.0
  %610 = vmatpush1.msra.mxu0 %v161
  %611 = vmatprep.subr.mxu0 0.0
  %612 = vmatpush1.msra.mxu0 %v162
  %613 = vmatprep.subr.mxu0 0.0
  %614 = vmatpush1.msra.mxu0 %v163
  %615 = vmatprep.subr.mxu0 0.0
  %616 = vmatpush1.msra.mxu0 %v164
  %617 = vmatprep.subr.mxu0 0.0
  %618 = vmatpush1.msra.mxu0 %v165
  %619 = vmatprep.subr.mxu0 0.0
  %620 = vmatpush1.msra.mxu0 %v166
  %621 = vmatprep.subr.mxu0 0.0
  %622 = vmatpush1.msra.mxu0 %v167
  %623 = vmatprep.subr.mxu0 0.0
  %624 = vmatpush1.msra.mxu0 %v168
  %625 = vmatprep.subr.mxu0 0.0
  %626 = vmatpush1.msra.mxu0 %v169
  %627 = vmatprep.subr.mxu0 0.0
  %628 = vmatpush1.msra.mxu0 %v170
  %629 = vmatprep.subr.mxu0 0.0
  %630 = vmatpush1.msra.mxu0 %v171
  %631 = vmatprep.subr.mxu0 0.0
  %632 = vmatpush1.msra.mxu0 %v172
  %633 = vmatprep.subr.mxu0 0.0
  %634 = vmatpush1.msra.mxu0 %v173
  %635 = vmatprep.subr.mxu0 0.0
  %636 = vmatpush1.msra.mxu0 %v174
  %637 = vmatprep.subr.mxu0 0.0
  %638 = vmatpush1.msra.mxu0 %v175
  %639 = vmatprep.subr.mxu0 0.0
  %640 = vmatpush1.msra.mxu0 %v176
  %641 = vmatprep.subr.mxu0 0.0
  %642 = vmatpush1.msra.mxu0 %v177
  %643 = vmatprep.subr.mxu0 0.0
  %644 = vmatpush1.msra.mxu0 %v178
  %645 = vmatprep.subr.mxu0 0.0
  %646 = vmatpush1.msra.mxu0 %v179
  %647 = vmatprep.subr.mxu0 0.0
  %648 = vmatpush1.msra.mxu0 %v180
  %649 = vmatprep.subr.mxu0 0.0
  %650 = vmatpush1.msra.mxu0 %v181
  %651 = vmatprep.subr.mxu0 0.0
  %652 = vmatpush1.msra.mxu0 %v182
  %653 = vmatprep.subr.mxu0 0.0
  %654 = vmatpush1.msra.mxu0 %v183
  %655 = vmatprep.subr.mxu0 0.0
  %656 = vmatpush1.msra.mxu0 %v184
  %657 = vmatprep.subr.mxu0 0.0
  %658 = vmatpush1.msra.mxu0 %v185
  %659 = vmatprep.subr.mxu0 0.0
  %660 = vmatpush1.msra.mxu0 %v186
  %661 = vmatprep.subr.mxu0 0.0
  %662 = vmatpush1.msra.mxu0 %v187
  %663 = vmatprep.subr.mxu0 0.0
  %664 = vmatpush1.msra.mxu0 %v188
  %665 = vmatprep.subr.mxu0 0.0
  %666 = vmatpush1.msra.mxu0 %v189
  %667 = vmatprep.subr.mxu0 0.0
  %668 = vmatpush1.msra.mxu0 %v190
  %669 = vmatprep.subr.mxu0 0.0
  %670 = vmatpush1.msra.mxu0 %v191
  %671 = vmatprep.mubr.f32.mxu0 %v23
  %672 = vmatmul.mubr.f32.gmra.mrb[0].mxu0 %v22
  %v673 = vpop.f32.mrb[0].mxu0
  %v674 = vadd.f32 %v604, %v673
  %v675 = vpop.f32.mrb[0].mxu0
  %676 = vdwg.mxu0
  %677 = vmatprep.subr.mxu0 0.0
  %678 = vmatpush1.msra.mxu0 %v192
  %679 = vmatprep.subr.mxu0 0.0
  %680 = vmatpush1.msra.mxu0 %v193
  %681 = vmatprep.subr.mxu0 0.0
  %682 = vmatpush1.msra.mxu0 %v194
  %683 = vmatprep.subr.mxu0 0.0
  %684 = vmatpush1.msra.mxu0 %v195
  %685 = vmatprep.subr.mxu0 0.0
  %686 = vmatpush1.msra.mxu0 %v196
  %687 = vmatprep.subr.mxu0 0.0
  %688 = vmatpush1.msra.mxu0 %v197
  %689 = vmatprep.subr.mxu0 0.0
  %690 = vmatpush1.msra.mxu0 %v198
  %691 = vmatprep.subr.mxu0 0.0
  %692 = vmatpush1.msra.mxu0 %v199
  %693 = vmatprep.subr.mxu0 0.0
  %694 = vmatpush1.msra.mxu0 %v200
  %695 = vmatprep.subr.mxu0 0.0
  %696 = vmatpush1.msra.mxu0 %v201
  %697 = vmatprep.subr.mxu0 0.0
  %698 = vmatpush1.msra.mxu0 %v202
  %699 = vmatprep.subr.mxu0 0.0
  %700 = vmatpush1.msra.mxu0 %v203
  %701 = vmatprep.subr.mxu0 0.0
  %702 = vmatpush1.msra.mxu0 %v204
  %703 = vmatprep.subr.mxu0 0.0
  %704 = vmatpush1.msra.mxu0 %v205
  %705 = vmatprep.subr.mxu0 0.0
  %706 = vmatpush1.msra.mxu0 %v206
  %707 = vmatprep.subr.mxu0 0.0
  %708 = vmatpush1.msra.mxu0 %v207
  %709 = vmatprep.subr.mxu0 0.0
  %710 = vmatpush1.msra.mxu0 %v208
  %711 = vmatprep.subr.mxu0 0.0
  %712 = vmatpush1.msra.mxu0 %v209
  %713 = vmatprep.subr.mxu0 0.0
  %714 = vmatpush1.msra.mxu0 %v210
  %715 = vmatprep.subr.mxu0 0.0
  %716 = vmatpush1.msra.mxu0 %v211
  %717 = vmatprep.subr.mxu0 0.0
  %718 = vmatpush1.msra.mxu0 %v212
  %719 = vmatprep.subr.mxu0 0.0
  %720 = vmatpush1.msra.mxu0 %v213
  %721 = vmatprep.subr.mxu0 0.0
  %722 = vmatpush1.msra.mxu0 %v214
  %723 = vmatprep.subr.mxu0 0.0
  %724 = vmatpush1.msra.mxu0 %v215
  %725 = vmatprep.subr.mxu0 0.0
  %726 = vmatpush1.msra.mxu0 %v216
  %727 = vmatprep.subr.mxu0 0.0
  %728 = vmatpush1.msra.mxu0 %v217
  %729 = vmatprep.subr.mxu0 0.0
  %730 = vmatpush1.msra.mxu0 %v218
  %731 = vmatprep.subr.mxu0 0.0
  %732 = vmatpush1.msra.mxu0 %v219
  %733 = vmatprep.subr.mxu0 0.0
  %734 = vmatpush1.msra.mxu0 %v220
  %735 = vmatprep.subr.mxu0 0.0
  %736 = vmatpush1.msra.mxu0 %v221
  %737 = vmatprep.subr.mxu0 0.0
  %738 = vmatpush1.msra.mxu0 %v222
  %739 = vmatprep.subr.mxu0 0.0
  %740 = vmatpush1.msra.mxu0 %v223
  %741 = vmatprep.mubr.f32.mxu0 %v25
  %742 = vmatmul.mubr.f32.gmra.mrb[0].mxu0 %v24
  %v743 = vpop.f32.mrb[0].mxu0
  %v744 = vadd.f32 %v674, %v743
  %v745 = vpop.f32.mrb[0].mxu0
  %746 = vdwg.mxu0
  %747 = vmatprep.subr.mxu0 0.0
  %748 = vmatpush1.msra.mxu0 %v224
  %749 = vmatprep.subr.mxu0 0.0
  %750 = vmatpush1.msra.mxu0 %v225
  %751 = vmatprep.subr.mxu0 0.0
  %752 = vmatpush1.msra.mxu0 %v226
  %753 = vmatprep.subr.mxu0 0.0
  %754 = vmatpush1.msra.mxu0 %v227
  %755 = vmatprep.subr.mxu0 0.0
  %756 = vmatpush1.msra.mxu0 %v228
  %757 = vmatprep.subr.mxu0 0.0
  %758 = vmatpush1.msra.mxu0 %v229
  %759 = vmatprep.subr.mxu0 0.0
  %760 = vmatpush1.msra.mxu0 %v230
  %761 = vmatprep.subr.mxu0 0.0
  %762 = vmatpush1.msra.mxu0 %v231
  %763 = vmatprep.subr.mxu0 0.0
  %764 = vmatpush1.msra.mxu0 %v232
  %765 = vmatprep.subr.mxu0 0.0
  %766 = vmatpush1.msra.mxu0 %v233
  %767 = vmatprep.subr.mxu0 0.0
  %768 = vmatpush1.msra.mxu0 %v234
  %769 = vmatprep.subr.mxu0 0.0
  %770 = vmatpush1.msra.mxu0 %v235
  %771 = vmatprep.subr.mxu0 0.0
  %772 = vmatpush1.msra.mxu0 %v236
  %773 = vmatprep.subr.mxu0 0.0
  %774 = vmatpush1.msra.mxu0 %v237
  %775 = vmatprep.subr.mxu0 0.0
  %776 = vmatpush1.msra.mxu0 %v238
  %777 = vmatprep.subr.mxu0 0.0
  %778 = vmatpush1.msra.mxu0 %v239
  %779 = vmatprep.subr.mxu0 0.0
  %780 = vmatpush1.msra.mxu0 %v240
  %781 = vmatprep.subr.mxu0 0.0
  %782 = vmatpush1.msra.mxu0 %v241
  %783 = vmatprep.subr.mxu0 0.0
  %784 = vmatpush1.msra.mxu0 %v242
  %785 = vmatprep.subr.mxu0 0.0
  %786 = vmatpush1.msra.mxu0 %v243
  %787 = vmatprep.subr.mxu0 0.0
  %788 = vmatpush1.msra.mxu0 %v244
  %789 = vmatprep.subr.mxu0 0.0
  %790 = vmatpush1.msra.mxu0 %v245
  %791 = vmatprep.subr.mxu0 0.0
  %792 = vmatpush1.msra.mxu0 %v246
  %793 = vmatprep.subr.mxu0 0.0
  %794 = vmatpush1.msra.mxu0 %v247
  %795 = vmatprep.subr.mxu0 0.0
  %796 = vmatpush1.msra.mxu0 %v248
  %797 = vmatprep.subr.mxu0 0.0
  %798 = vmatpush1.msra.mxu0 %v249
  %799 = vmatprep.subr.mxu0 0.0
  %800 = vmatpush1.msra.mxu0 %v250
  %801 = vmatprep.subr.mxu0 0.0
  %802 = vmatpush1.msra.mxu0 %v251
  %803 = vmatprep.subr.mxu0 0.0
  %804 = vmatpush1.msra.mxu0 %v252
  %805 = vmatprep.subr.mxu0 0.0
  %806 = vmatpush1.msra.mxu0 %v253
  %807 = vmatprep.subr.mxu0 0.0
  %808 = vmatpush1.msra.mxu0 %v254
  %809 = vmatprep.subr.mxu0 0.0
  %810 = vmatpush1.msra.mxu0 %v255
  %811 = vmatprep.mubr.f32.mxu0 %v27
  %812 = vmatmul.mubr.f32.gmra.mrb[0].mxu0 %v26
  %v813 = vpop.f32.mrb[0].mxu0
  %v814 = vadd.f32 %v744, %v813
  %v815 = vpop.f32.mrb[0].mxu0
  %816 = vdwg.mxu0
  %817 = vmatprep.subr.mxu0 0.0
  %818 = vmatpush1.msra.mxu0 %v256
  %819 = vmatprep.subr.mxu0 0.0
  %820 = vmatpush1.msra.mxu0 %v257
  %821 = vmatprep.subr.mxu0 0.0
  %822 = vmatpush1.msra.mxu0 %v258
  %823 = vmatprep.subr.mxu0 0.0
  %824 = vmatpush1.msra.mxu0 %v259
  %825 = vmatprep.subr.mxu0 0.0
  %826 = vmatpush1.msra.mxu0 %v260
  %827 = vmatprep.subr.mxu0 0.0
  %828 = vmatpush1.msra.mxu0 %v261
  %829 = vmatprep.subr.mxu0 0.0
  %830 = vmatpush1.msra.mxu0 %v262
  %831 = vmatprep.subr.mxu0 0.0
  %832 = vmatpush1.msra.mxu0 %v263
  %833 = vmatprep.subr.mxu0 0.0
  %834 = vmatpush1.msra.mxu0 %v264
  %835 = vmatprep.subr.mxu0 0.0
  %836 = vmatpush1.msra.mxu0 %v265
  %837 = vmatprep.subr.mxu0 0.0
  %838 = vmatpush1.msra.mxu0 %v266
  %839 = vmatprep.subr.mxu0 0.0
  %840 = vmatpush1.msra.mxu0 %v267
  %841 = vmatprep.subr.mxu0 0.0
  %842 = vmatpush1.msra.mxu0 %v268
  %843 = vmatprep.subr.mxu0 0.0
  %844 = vmatpush1.msra.mxu0 %v269
  %845 = vmatprep.subr.mxu0 0.0
  %846 = vmatpush1.msra.mxu0 %v270
  %847 = vmatprep.subr.mxu0 0.0
  %848 = vmatpush1.msra.mxu0 %v271
  %849 = vmatprep.subr.mxu0 0.0
  %850 = vmatpush1.msra.mxu0 %v272
  %851 = vmatprep.subr.mxu0 0.0
  %852 = vmatpush1.msra.mxu0 %v273
  %853 = vmatprep.subr.mxu0 0.0
  %854 = vmatpush1.msra.mxu0 %v274
  %855 = vmatprep.subr.mxu0 0.0
  %856 = vmatpush1.msra.mxu0 %v275
  %857 = vmatprep.subr.mxu0 0.0
  %858 = vmatpush1.msra.mxu0 %v276
  %859 = vmatprep.subr.mxu0 0.0
  %860 = vmatpush1.msra.mxu0 %v277
  %861 = vmatprep.subr.mxu0 0.0
  %862 = vmatpush1.msra.mxu0 %v278
  %863 = vmatprep.subr.mxu0 0.0
  %864 = vmatpush1.msra.mxu0 %v279
  %865 = vmatprep.subr.mxu0 0.0
  %866 = vmatpush1.msra.mxu0 %v280
  %867 = vmatprep.subr.mxu0 0.0
  %868 = vmatpush1.msra.mxu0 %v281
  %869 = vmatprep.subr.mxu0 0.0
  %870 = vmatpush1.msra.mxu0 %v282
  %871 = vmatprep.subr.mxu0 0.0
  %872 = vmatpush1.msra.mxu0 %v283
  %873 = vmatprep.subr.mxu0 0.0
  %874 = vmatpush1.msra.mxu0 %v284
  %875 = vmatprep.subr.mxu0 0.0
  %876 = vmatpush1.msra.mxu0 %v285
  %877 = vmatprep.subr.mxu0 0.0
  %878 = vmatpush1.msra.mxu0 %v286
  %879 = vmatprep.subr.mxu0 0.0
  %880 = vmatpush1.msra.mxu0 %v287
  %881 = vmatprep.mubr.f32.mxu0 %v29
  %882 = vmatmul.mubr.f32.gmra.mrb[0].mxu0 %v28
  %v883 = vpop.f32.mrb[0].mxu0
  %v884 = vadd.f32 %v814, %v883
  %v885 = vpop.f32.mrb[0].mxu0
  %886 = vdwg.mxu0
  %887 = vmatprep.subr.mxu0 0.0
  %888 = vmatpush1.msra.mxu0 %v288
  %889 = vmatprep.subr.mxu0 0.0
  %890 = vmatpush1.msra.mxu0 %v289
  %891 = vmatprep.subr.mxu0 0.0
  %892 = vmatpush1.msra.mxu0 %v290
  %893 = vmatprep.subr.mxu0 0.0
  %894 = vmatpush1.msra.mxu0 %v291
  %895 = vmatprep.subr.mxu0 0.0
  %896 = vmatpush1.msra.mxu0 %v292
  %897 = vmatprep.subr.mxu0 0.0
  %898 = vmatpush1.msra.mxu0 %v293
  %899 = vmatprep.subr.mxu0 0.0
  %900 = vmatpush1.msra.mxu0 %v294
  %901 = vmatprep.subr.mxu0 0.0
  %902 = vmatpush1.msra.mxu0 %v295
  %903 = vmatprep.subr.mxu0 0.0
  %904 = vmatpush1.msra.mxu0 %v296
  %905 = vmatprep.subr.mxu0 0.0
  %906 = vmatpush1.msra.mxu0 %v297
  %907 = vmatprep.subr.mxu0 0.0
  %908 = vmatpush1.msra.mxu0 %v298
  %909 = vmatprep.subr.mxu0 0.0
  %910 = vmatpush1.msra.mxu0 %v299
  %911 = vmatprep.subr.mxu0 0.0
  %912 = vmatpush1.msra.mxu0 %v300
  %913 = vmatprep.subr.mxu0 0.0
  %914 = vmatpush1.msra.mxu0 %v301
  %915 = vmatprep.subr.mxu0 0.0
  %916 = vmatpush1.msra.mxu0 %v302
  %917 = vmatprep.subr.mxu0 0.0
  %918 = vmatpush1.msra.mxu0 %v303
  %919 = vmatprep.subr.mxu0 0.0
  %920 = vmatpush1.msra.mxu0 %v304
  %921 = vmatprep.subr.mxu0 0.0
  %922 = vmatpush1.msra.mxu0 %v305
  %923 = vmatprep.subr.mxu0 0.0
  %924 = vmatpush1.msra.mxu0 %v306
  %925 = vmatprep.subr.mxu0 0.0
  %926 = vmatpush1.msra.mxu0 %v307
  %927 = vmatprep.subr.mxu0 0.0
  %928 = vmatpush1.msra.mxu0 %v308
  %929 = vmatprep.subr.mxu0 0.0
  %930 = vmatpush1.msra.mxu0 %v309
  %931 = vmatprep.subr.mxu0 0.0
  %932 = vmatpush1.msra.mxu0 %v310
  %933 = vmatprep.subr.mxu0 0.0
  %934 = vmatpush1.msra.mxu0 %v311
  %935 = vmatprep.subr.mxu0 0.0
  %936 = vmatpush1.msra.mxu0 %v312
  %937 = vmatprep.subr.mxu0 0.0
  %938 = vmatpush1.msra.mxu0 %v313
  %939 = vmatprep.subr.mxu0 0.0
  %940 = vmatpush1.msra.mxu0 %v314
  %941 = vmatprep.subr.mxu0 0.0
  %942 = vmatpush1.msra.mxu0 %v315
  %943 = vmatprep.subr.mxu0 0.0
  %944 = vmatpush1.msra.mxu0 %v316
  %945 = vmatprep.subr.mxu0 0.0
  %946 = vmatpush1.msra.mxu0 %v317
  %947 = vmatprep.subr.mxu0 0.0
  %948 = vmatpush1.msra.mxu0 %v318
  %949 = vmatprep.subr.mxu0 0.0
  %950 = vmatpush1.msra.mxu0 %v319
  %951 = vmatprep.mubr.f32.mxu0 %v31
  %952 = vmatmul.mubr.f32.gmra.mrb[0].mxu0 %v30
  %v953 = vpop.f32.mrb[0].mxu0
  %v954 = vadd.f32 %v884, %v953
  %v955 = vpop.f32.mrb[0].mxu0
  %956 = vdwg.mxu0
  %958 = vrot.lane.b32.xlu0 %v954, 127
  %v959 = vpop.permute.xlu0 %958
  %v961 = vsub.f32 %v954, %v959
  %v962 = vxor.u32 %v961, 2147483648
  %v963 = vmul.f32 %v962, 1.442695
  %v964 = vpow.pop %v963
  %v965 = vadd.f32 %v964, 1.0
  %v966 = vrcp.pop %v965
  %v967 = vmul.f32 1.0, %v966
  %v968 = vsub.f32 1.0, %v967
  %970 = vrot.lane.b32.xlu0 %v968, 1
  %v971 = vpop.permute.xlu0 %970
  %vm973 = vcmask 7168
  %v974 = vsel %vm973, %v967, %v971
  %vm975 = vcmask 15360
  %976 = vst.msk [vmem:[%s3] sm:$0xff] %vm975, %v974
  // Predicated region
  $region14: #{tpu_custom_call.1} parent=0 // pred_check
    _
  $region15: #{tpu_custom_call.1} parent=0 // pred_check_branch
    %978 = sbr.rel (0) target = $region17
  $region16: #{tpu_custom_call.1} parent=0 // pred_region
    _
  $region17: #{tpu_custom_call.1} parent=0 // pred_fallthru
    _
  // Predicated region
  $region18: #{tpu_custom_call.1} parent=0 // pred_check
    _
  $region19: #{tpu_custom_call.1} parent=0 // pred_check_branch
    %980 = sbr.rel (0) target = $region21
  $region20: #{tpu_custom_call.1} parent=0 // pred_region
    _
  $region21: #{tpu_custom_call.1} parent=0 // pred_fallthru
    _

</llo_original>
